<compile_context>
chip_gen: v5e
topology: v5e:2x2
jax: 0.10.0
libtpu: 0.0.40
codegen_flags: <defaults>
</compile_context>

<pallas_src>
import functools

import jax
import jax.numpy as jnp
from jax.experimental import pallas as pl
from jax.experimental.pallas import tpu as pltpu


def _vmem_capacity_bytes():
    """Physical VMEM per core; conservative 64 MiB (v7x-sized) fallback."""
    try:
        cap = getattr(pltpu.get_tpu_info(), "vmem_capacity_bytes", None)
        if cap:
            return int(cap)
    except Exception:
        pass
    return 64 << 20


def _ceil_div(a, b):
    return -(-a // b)


def _largest_divisor_leq(n, cap):
    cap = max(1, min(n, cap))
    for d in range(cap, 0, -1):
        if n % d == 0:
            return d
    return 1


def _choose_tiling(n, c, hw, budget_bytes):
    """Pick (bn, tl, r): batch fold, lane tile, in-register reduce factor."""
    if hw <= 128:
        tl = hw                                 # single (possibly odd) lane block
    else:
        max_tl = max(128, (budget_bytes // (c * 4)) // 128 * 128)
        hw_pad = _ceil_div(hw, 128) * 128
        tl = min(max_tl, hw_pad)
        if hw % 128 == 0:
            while hw % tl != 0:                 # prefer an exact tile (no tail)
                tl -= 128
    lane_blocks = _ceil_div(hw, tl)
    bn = 1
    if lane_blocks == 1:
        # Whole H*W in one block: fold batch samples to amortize grid overhead.
        bn = _largest_divisor_leq(n, budget_bytes // max(1, c * tl * 4))
    # In-register tree-reduce factor for the accumulator (cuts scratch RMWs).
    r = 1
    if tl % 128 == 0:
        for cand in (8, 4, 2):
            if tl % (128 * cand) == 0:
                r = cand
                break
    return bn, tl, r


def _bn_stats_kernel(x_ref, psum_ref, psq_ref, sum_acc, sq_acc, *, hw, tl, r):
    """Pass 1: per-batch-block partial per-channel sum / sum-of-squares.

    x_ref:     (BN, C, TL) input tile, cast to f32 (matches x.float()).
    psum/psq:  (1, C, 1) f32 per-batch-block outputs, written at the last lane
               step.  The batch grid axis is independent -> megacore parallel.
    sum_acc/sq_acc: (C, TL//R) lane-resident f32 partials; one XLU lane
               reduction per batch block.
    """
    li = pl.program_id(1)

    @pl.when(li == 0)
    def _init():
        sum_acc[...] = jnp.zeros_like(sum_acc)
        sq_acc[...] = jnp.zeros_like(sq_acc)

    x = x_ref[...].astype(jnp.float32)                      # (BN, C, TL)
    if hw % tl != 0:
        # Masked tail block: zero lanes past the true H*W extent.
        lane = jax.lax.broadcasted_iota(jnp.int32, x.shape, 2)
        x = jnp.where(li * tl + lane < hw, x, 0.0)

    xs = jnp.sum(x, axis=0)                                 # (C, TL)  VPU adds
    xq = jnp.sum(x * x, axis=0)                             # (C, TL)
    cw = tl // r
    s_part = xs[:, 0:cw]
    q_part = xq[:, 0:cw]
    for k in range(1, r):                                   # in-register tree-add
        s_part = s_part + xs[:, k * cw:(k + 1) * cw]
        q_part = q_part + xq[:, k * cw:(k + 1) * cw]
    sum_acc[...] += s_part
    sq_acc[...] += q_part

    @pl.when(li == pl.num_programs(1) - 1)
    def _finalize():
        psum_ref[0] = jnp.sum(sum_acc[...], axis=1, keepdims=True)   # (C, 1)
        psq_ref[0] = jnp.sum(sq_acc[...], axis=1, keepdims=True)


def _bn_apply_kernel(x_ref, scale_ref, bias_ref, o_ref):
    """Pass 2: y = x * scale + bias (per-channel scale/bias pre-fused)."""
    x = x_ref[...].astype(jnp.float32)                      # (BN, C, TL)
    o_ref[...] = (x * scale_ref[...] + bias_ref[...]).astype(o_ref.dtype)


def _bn_fused_kernel(x_ref, gamma_ref, beta_ref, o_ref, *, eps, inv_count):
    """Single-read path: x resident in VMEM, stats + normalize in one kernel."""
    x = x_ref[...].astype(jnp.float32)                      # (N, C, HW)
    mean = jnp.sum(jnp.sum(x, axis=2, keepdims=True), axis=0, keepdims=True)
    mean = mean * inv_count                                 # (1, C, 1)
    xc = x - mean
    var = jnp.sum(jnp.sum(xc * xc, axis=2, keepdims=True), axis=0, keepdims=True)
    var = var * inv_count
    scale = gamma_ref[...] * jax.lax.rsqrt(var + eps)       # (1, C, 1)
    o_ref[...] = (xc * scale + beta_ref[...]).astype(o_ref.dtype)


def batchnorm_wrapper_forward(x, gamma, beta, eps=1e-5):
    """Pallas TPU forward of BatchNormWrapper(nn.BatchNorm2d(C)), train mode.

    x: (N, C, H, W) in any float dtype; gamma, beta: (C,).
    Returns same shape and dtype as x.
    TODO(synk): running_mean/running_var EMA updates of train-mode BatchNorm are
    stateful side effects and are not modeled; only the forward output matches.
    """
    n, c, h, w = x.shape
    in_dtype = x.dtype
    hw = h * w
    total = n * c * hw
    itemsize = jnp.dtype(in_dtype).itemsize
    inv_count = 1.0 / float(n * hw)

    x3 = x.reshape(n, c, hw)                 # free reshape, native layout kept
    gamma_f = gamma.reshape(c, 1).astype(jnp.float32)
    beta_f = beta.reshape(c, 1).astype(jnp.float32)

    vmem_cap = _vmem_capacity_bytes()
    vmem_limit = int(0.85 * vmem_cap)

    # ---- Fused single-read path: whole activation resident in VMEM ----------
    if total * 4 <= min(vmem_cap // 10, 8 << 20):
        fused = functools.partial(_bn_fused_kernel, eps=float(eps),
                                  inv_count=inv_count)
        y3 = pl.pallas_call(
            fused,
            out_shape=jax.ShapeDtypeStruct((n, c, hw), in_dtype),
            grid=(1,),
            in_specs=[pl.BlockSpec((n, c, hw), lambda i: (0, 0, 0)),
                      pl.BlockSpec((1, c, 1), lambda i: (0, 0, 0)),
                      pl.BlockSpec((1, c, 1), lambda i: (0, 0, 0))],
            out_specs=pl.BlockSpec((n, c, hw), lambda i: (0, 0, 0)),
            compiler_params=pltpu.CompilerParams(
                dimension_semantics=("arbitrary",),
                vmem_limit_bytes=vmem_limit),
            cost_estimate=pl.CostEstimate(
                flops=6 * total, transcendentals=c,
                bytes_accessed=2 * total * itemsize),
        )(x3, gamma_f.reshape(1, c, 1), beta_f.reshape(1, c, 1))
        return y3.reshape(n, c, h, w)

    # ---- Streaming two-pass path ---------------------------------------------
    # f32 tile budget: ~2 MiB on 64 MiB-VMEM parts (v7x), ~6 MiB on 128 MiB
    # parts (v5e/v6e) -> bigger tiles / fewer grid steps where VMEM allows.
    budget = (6 << 20) if vmem_cap > (96 << 20) else (2 << 20)
    bn, tl, r = _choose_tiling(n, c, hw, budget)
    nb = n // bn
    lane_blocks = _ceil_div(hw, tl)
    grid = (nb, lane_blocks)

    x_spec = pl.BlockSpec((bn, c, tl), lambda i, j: (i, 0, j))
    part_spec = pl.BlockSpec((1, c, 1), lambda i, j: (i, 0, 0))
    vec_spec = pl.BlockSpec((1, c, 1), lambda i, j: (0, 0, 0))

    # Pass 1: per-batch-block partial statistics.  Batch axis "parallel" so both
    # v7x TensorCores stream half the stats work; lane axis is the sequential
    # per-block accumulator axis.
    stats_kernel = functools.partial(_bn_stats_kernel, hw=hw, tl=tl, r=r)
    psum, psq = pl.pallas_call(
        stats_kernel,
        out_shape=(jax.ShapeDtypeStruct((nb, c, 1), jnp.float32),
                   jax.ShapeDtypeStruct((nb, c, 1), jnp.float32)),
        grid=grid,
        in_specs=[x_spec],
        out_specs=(part_spec, part_spec),
        scratch_shapes=[pltpu.VMEM((c, tl // r), jnp.float32),
                        pltpu.VMEM((c, tl // r), jnp.float32)],
        compiler_params=pltpu.CompilerParams(
            dimension_semantics=("parallel", "arbitrary"),
            vmem_limit_bytes=vmem_limit),
        cost_estimate=pl.CostEstimate(
            flops=3 * total, transcendentals=0,
            bytes_accessed=total * itemsize),
    )(x3)

    # Tiny final combine in plain JAX (C-length vectors only).
    s = jnp.sum(psum, axis=0)                               # (C, 1)
    ss = jnp.sum(psq, axis=0)                               # (C, 1)
    mean = s * inv_count
    # TODO(synk): E[x^2]-mean^2 in f32 can lose precision when |mean| >> std; a
    # per-channel shifted accumulation would be more robust for offset-heavy data.
    var = jnp.maximum(ss * inv_count - mean * mean, 0.0)
    inv_std = jax.lax.rsqrt(var + eps)
    scale = (gamma_f * inv_std).reshape(1, c, 1)
    bias = (beta_f - mean * gamma_f * inv_std).reshape(1, c, 1)

    # Pass 2: y = x*scale + bias, fully parallel grid (megacore-shardable).
    y3 = pl.pallas_call(
        _bn_apply_kernel,
        out_shape=jax.ShapeDtypeStruct((n, c, hw), in_dtype),
        grid=grid,
        in_specs=[x_spec, vec_spec, vec_spec],
        out_specs=x_spec,
        compiler_params=pltpu.CompilerParams(
            dimension_semantics=("parallel", "parallel"),
            vmem_limit_bytes=vmem_limit),
        cost_estimate=pl.CostEstimate(
            flops=2 * total, transcendentals=0,
            bytes_accessed=2 * total * itemsize),
    )(x3, scale, bias)

    return y3.reshape(n, c, h, w)


def _reference_bn_train(x, gamma, beta, eps=1e-5):
    in_dtype = x.dtype
    xf = x.astype(jnp.float32)
    mean = jnp.mean(xf, axis=(0, 2, 3), keepdims=True)
    var = jnp.mean((xf - mean) ** 2, axis=(0, 2, 3), keepdims=True)
    y = (xf - mean) * jax.lax.rsqrt(var + eps)
    y = y * gamma.reshape(1, -1, 1, 1) + beta.reshape(1, -1, 1, 1)
    return y.astype(in_dtype)


if __name__ == "__main__":
    key = jax.random.PRNGKey(0)
    bn_fwd = jax.jit(batchnorm_wrapper_forward)

    def _check(shape, dtype, tol, k):
        kx, kg, kb = jax.random.split(k, 3)
        _, c, _, _ = shape
        x = jax.random.normal(kx, shape, dtype=dtype)
        # PyTorch default init is gamma=1, beta=0; perturb deterministically so
        # the affine path is actually exercised.
        gamma = 1.0 + 0.1 * jax.random.normal(kg, (c,), dtype=jnp.float32)
        beta = 0.1 * jax.random.normal(kb, (c,), dtype=jnp.float32)
        y = jax.block_until_ready(bn_fwd(x, gamma, beta))
        y_ref = _reference_bn_train(x, gamma, beta)
        assert y.shape == x.shape and y.dtype == x.dtype
        err = float(jnp.max(jnp.abs(y.astype(jnp.float32) -
                                    y_ref.astype(jnp.float32))))
        assert err < tol, f"{shape} {dtype}: max abs err {err} >= {tol}"

    k0, k1, k2 = jax.random.split(key, 3)
    # Small activation -> fused single-read path.
    _check((2, 4, 16, 16), jnp.bfloat16, 5e-2, k0)
    # Larger, 128-aligned H*W -> streaming two-pass path (batch-parallel stats).
    _check((4, 64, 96, 96), jnp.bfloat16, 5e-2, k1)
    # Odd H*W -> masked-tail lane tiles in the streaming path.
    _check((4, 64, 100, 100), jnp.float32, 5e-3, k2)

    print("KERNEL_OK")
</pallas_src>

<mosaic_0001>
module attributes {stable_mosaic.version = 11 : i64} {
  func.func @_bn_fused_kernel(%arg0: i32, %arg1: memref<2x4x256xbf16, #tpu.memory_space<vmem>>, %arg2: memref<1x4x1xf32, #tpu.memory_space<vmem>>, %arg3: memref<1x4x1xf32, #tpu.memory_space<vmem>>, %arg4: memref<2x4x256xbf16, #tpu.memory_space<vmem>>) attributes {dimension_semantics = [#tpu.dimension_semantics<arbitrary>], iteration_bounds = array<i64: 1>, scalar_prefetch = 0 : i64, scratch_operands = 0 : i64, tpu.core_type = #tpu.core_type<tc>, window_params = [{pipeline_mode = #tpu.pipeline_mode<synchronous>, transform_indices = @transform_0, window_bounds = array<i64: 2, 4, 256>}, {pipeline_mode = #tpu.pipeline_mode<synchronous>, transform_indices = @transform_1, window_bounds = array<i64: 1, 4, 1>}, {pipeline_mode = #tpu.pipeline_mode<synchronous>, transform_indices = @transform_2, window_bounds = array<i64: 1, 4, 1>}, {pipeline_mode = #tpu.pipeline_mode<synchronous>, transform_indices = @transform_3, window_bounds = array<i64: 2, 4, 256>}]} {
    %c0 = arith.constant 0 : index
    %c0_0 = arith.constant 0 : index
    %c0_1 = arith.constant 0 : index
    %0 = vector.load %arg1[%c0, %c0_0, %c0_1] : memref<2x4x256xbf16, #tpu.memory_space<vmem>>, vector<2x4x256xbf16>
    %1 = arith.extf %0 : vector<2x4x256xbf16> to vector<2x4x256xf32>
    %cst = arith.constant dense<0.000000e+00> : vector<2x4xf32>
    %2 = vector.multi_reduction <add>, %1, %cst [2] : vector<2x4x256xf32> to vector<2x4xf32>
    %3 = vector.shape_cast %2 : vector<2x4xf32> to vector<2x4x1xf32>
    %cst_2 = arith.constant dense<0.000000e+00> : vector<4x1xf32>
    %4 = vector.multi_reduction <add>, %3, %cst_2 [0] : vector<2x4x1xf32> to vector<4x1xf32>
    %5 = vector.shape_cast %4 : vector<4x1xf32> to vector<1x4x1xf32>
    %cst_3 = arith.constant 0.001953125 : f32
    %6 = vector.broadcast %cst_3 : f32 to vector<1x4x1xf32>
    %7 = arith.mulf %5, %6 : vector<1x4x1xf32>
    %8 = vector.broadcast %7 : vector<1x4x1xf32> to vector<2x4x256xf32>
    %9 = arith.subf %1, %8 : vector<2x4x256xf32>
    %10 = arith.mulf %9, %9 : vector<2x4x256xf32>
    %cst_4 = arith.constant dense<0.000000e+00> : vector<2x4xf32>
    %11 = vector.multi_reduction <add>, %10, %cst_4 [2] : vector<2x4x256xf32> to vector<2x4xf32>
    %12 = vector.shape_cast %11 : vector<2x4xf32> to vector<2x4x1xf32>
    %cst_5 = arith.constant dense<0.000000e+00> : vector<4x1xf32>
    %13 = vector.multi_reduction <add>, %12, %cst_5 [0] : vector<2x4x1xf32> to vector<4x1xf32>
    %14 = vector.shape_cast %13 : vector<4x1xf32> to vector<1x4x1xf32>
    %cst_6 = arith.constant 0.001953125 : f32
    %15 = vector.broadcast %cst_6 : f32 to vector<1x4x1xf32>
    %16 = arith.mulf %14, %15 : vector<1x4x1xf32>
    %c0_7 = arith.constant 0 : index
    %c0_8 = arith.constant 0 : index
    %c0_9 = arith.constant 0 : index
    %17 = vector.load %arg2[%c0_7, %c0_8, %c0_9] : memref<1x4x1xf32, #tpu.memory_space<vmem>>, vector<1x4x1xf32>
    %cst_10 = arith.constant 9.99999974E-6 : f32
    %18 = vector.broadcast %cst_10 : f32 to vector<1x4x1xf32>
    %19 = arith.addf %16, %18 : vector<1x4x1xf32>
    %20 = math.rsqrt %19 : vector<1x4x1xf32>
    %21 = arith.mulf %17, %20 : vector<1x4x1xf32>
    %22 = vector.broadcast %21 : vector<1x4x1xf32> to vector<2x4x256xf32>
    %23 = arith.mulf %9, %22 : vector<2x4x256xf32>
    %c0_11 = arith.constant 0 : index
    %c0_12 = arith.constant 0 : index
    %c0_13 = arith.constant 0 : index
    %24 = vector.load %arg3[%c0_11, %c0_12, %c0_13] : memref<1x4x1xf32, #tpu.memory_space<vmem>>, vector<1x4x1xf32>
    %25 = vector.broadcast %24 : vector<1x4x1xf32> to vector<2x4x256xf32>
    %26 = arith.addf %23, %25 : vector<2x4x256xf32>
    %27 = arith.truncf %26 : vector<2x4x256xf32> to vector<2x4x256xbf16>
    %c0_14 = arith.constant 0 : index
    %c0_15 = arith.constant 0 : index
    %c0_16 = arith.constant 0 : index
    %28 = vector.load %arg4[%c0_14, %c0_15, %c0_16] : memref<2x4x256xbf16, #tpu.memory_space<vmem>>, vector<2x4x256xbf16>
    tpu.vector_store %arg4[%c0_14, %c0_15, %c0_16], %27 {strides = array<i32>} : memref<2x4x256xbf16, #tpu.memory_space<vmem>>, vector<2x4x256xbf16>,
    return
  }
  func.func @transform_0(%arg0: i32) -> (i32, i32, i32) {
    %c0_i32 = arith.constant 0 : i32
    %c0_i32_0 = arith.constant 0 : i32
    %c0_i32_1 = arith.constant 0 : i32
    %c0_i32_2 = arith.constant 0 : i32
    return %c0_i32, %c0_i32_0, %c0_i32_1 : i32, i32, i32
  }
  func.func @transform_1(%arg0: i32) -> (i32, i32, i32) {
    %c0_i32 = arith.constant 0 : i32
    %c0_i32_0 = arith.constant 0 : i32
    %c0_i32_1 = arith.constant 0 : i32
    %c0_i32_2 = arith.constant 0 : i32
    return %c0_i32, %c0_i32_0, %c0_i32_1 : i32, i32, i32
  }
  func.func @transform_2(%arg0: i32) -> (i32, i32, i32) {
    %c0_i32 = arith.constant 0 : i32
    %c0_i32_0 = arith.constant 0 : i32
    %c0_i32_1 = arith.constant 0 : i32
    %c0_i32_2 = arith.constant 0 : i32
    return %c0_i32, %c0_i32_0, %c0_i32_1 : i32, i32, i32
  }
  func.func @transform_3(%arg0: i32) -> (i32, i32, i32) {
    %c0_i32 = arith.constant 0 : i32
    %c0_i32_0 = arith.constant 0 : i32
    %c0_i32_1 = arith.constant 0 : i32
    %c0_i32_2 = arith.constant 0 : i32
    return %c0_i32, %c0_i32_0, %c0_i32_1 : i32, i32, i32
  }
}

</mosaic_0001>

<llo_original>
// kernel: batchnorm_wrapper_forward.1
$region0: #{batchnorm_wrapper_forward.1}
  #allocation0 [shape = 'u32[]', space=smem, size = 0x4, offset = 0x4, fixed_abs, tag = 'smem constant byte address 0x4 - core index']
  #allocation1 [shape = 'u32[72,128]{1,0:T(1,128)}', space=vmem, size = 0x9000, scoped, tag = 'internal scratch']
  %s0 = inlined_call_operand.vmem [shape: bf16[2,4,256], index: 0, kind: input, shape index: {}]
  %s1 = inlined_call_operand.vmem [shape: f32[1,4,1], index: 1, kind: input, shape index: {}]
  %s2 = inlined_call_operand.vmem [shape: f32[1,4,1], index: 2, kind: input, shape index: {}]
  %s3 = inlined_call_operand.vmem [shape: bf16[2,4,256], index: 3, kind: output, shape index: {}]
  %s4 = sld [smem:[#allocation0]]
  $region22: #{batchnorm_wrapper_forward.1} parent=0
    _
  %s6 = ssub.s32 1, %s4
  %s7 = scalar_select 0, %s6, %s4
  // Predicated region
  $region2: #{batchnorm_wrapper_forward.1} parent=0 // pred_check
    _
  $region3: #{batchnorm_wrapper_forward.1} parent=0 // pred_check_branch
    %9 = sbr.rel (0) target = $region5
  $region4: #{batchnorm_wrapper_forward.1} parent=0 // pred_region
    _
  $region5: #{batchnorm_wrapper_forward.1} parent=0 // pred_fallthru
    _
  // Predicated region
  $region6: #{batchnorm_wrapper_forward.1} parent=0 // pred_check
    _
  $region7: #{batchnorm_wrapper_forward.1} parent=0 // pred_check_branch
    %11 = sbr.rel (0) target = $region9
  $region8: #{batchnorm_wrapper_forward.1} parent=0 // pred_region
    _
  $region9: #{batchnorm_wrapper_forward.1} parent=0 // pred_fallthru
    _
  // Predicated region
  $region10: #{batchnorm_wrapper_forward.1} parent=0 // pred_check
    _
  $region11: #{batchnorm_wrapper_forward.1} parent=0 // pred_check_branch
    %13 = sbr.rel (0) target = $region13
  $region12: #{batchnorm_wrapper_forward.1} parent=0 // pred_region
    _
  $region13: #{batchnorm_wrapper_forward.1} parent=0 // pred_fallthru
    _
  %v14 = vld [vmem:[%s0] sm:$0xf]
  %v15 = vld [vmem:[%s0 + $0x4] sm:$0xf]
  %v16 = vunpack.c.l.bf16 %v14
  %v17 = vunpack.c.l.bf16 %v15
  %20 = vst [vmem:[#allocation1] ss:$2 sm:$0xff] %v16
  %v21 = vld.sshfl [vmem:[#allocation1] sm:$0xff pattern:$0x75316420]
  %v22 = vld.sshfl [vmem:[#allocation1 + $0x8] sm:$0xff pattern:$0x75316420]
  %s23 = scalar_lea.vmem [#allocation1], 16
  %24 = vst [vmem:[%s23] ss:$2 sm:$0xff] %v17
  %v25 = vld.sshfl [vmem:[#allocation1 + $0x10] sm:$0xff pattern:$0x75316420]
  %v26 = vld.sshfl [vmem:[#allocation1 + $0x18] sm:$0xff pattern:$0x75316420]
  %vm31 = vcmask 1043456
  %v32 = vsel %vm31, %v21, 0.0
  %v33 = vsel %vm31, %v22, 0.0
  %v34 = vadd.f32 %v32, %v33
  %35 = vadd.xlane.f32.xlu0 %v34
  %v36 = vpop.xlane.xlu0 %35
  %v37 = vsel %vm31, %v25, 0.0
  %v38 = vsel %vm31, %v26, 0.0
  %v39 = vadd.f32 %v37, %v38
  %40 = vadd.xlane.f32.xlu0 %v39
  %v41 = vpop.xlane.xlu0 %40
  %v42 = vsel %vm31, %v36, 0.0
  %v43 = vsel %vm31, %v41, 0.0
  %v44 = vadd.f32 %v42, %v43
  %v45 = vmul.f32 %v44, 0.001953125
  %v48 = vunpack.c.l.s4 839922192
  %v49 = vunpack.c.0.s8 %v48
  %v50 = vperm.slane %v45, %v49
  %v52 = vsub.f32 %v16, %v50
  %v53 = vsub.f32 %v17, %v50
  %v54 = vmul.f32 %v52, %v52
  %v55 = vmul.f32 %v53, %v53
  %58 = vst [vmem:[#allocation1] ss:$2 sm:$0xff] %v54
  %v59 = vld.sshfl [vmem:[#allocation1] sm:$0xff pattern:$0x75316420]
  %v60 = vld.sshfl [vmem:[#allocation1 + $0x8] sm:$0xff pattern:$0x75316420]
  %s61 = scalar_lea.vmem [#allocation1], 16
  %62 = vst [vmem:[%s61] ss:$2 sm:$0xff] %v55
  %v63 = vld.sshfl [vmem:[#allocation1 + $0x10] sm:$0xff pattern:$0x75316420]
  %v64 = vld.sshfl [vmem:[#allocation1 + $0x18] sm:$0xff pattern:$0x75316420]
  %v69 = vsel %vm31, %v59, 0.0
  %v70 = vsel %vm31, %v60, 0.0
  %v71 = vadd.f32 %v69, %v70
  %72 = vadd.xlane.f32.xlu0 %v71
  %v73 = vpop.xlane.xlu0 %72
  %v74 = vsel %vm31, %v63, 0.0
  %v75 = vsel %vm31, %v64, 0.0
  %v76 = vadd.f32 %v74, %v75
  %77 = vadd.xlane.f32.xlu0 %v76
  %v78 = vpop.xlane.xlu0 %77
  %v79 = vsel %vm31, %v73, 0.0
  %v80 = vsel %vm31, %v78, 0.0
  %v81 = vadd.f32 %v79, %v80
  %v82 = vmul.f32 %v81, 0.001953125
  %v83 = vld [vmem:[%s1] sm:$0xf]
  %v84 = vadd.f32 %v82, 1e-05
  %v85 = vrsqrt.pop %v84
  %v86 = vmul.f32 %v85, %v84
  %v87 = vmul.f32 %v86, %v85
  %v88 = vmul.f32 0.5, %v87
  %v89 = vsub.f32 1.5, %v88
  %v90 = vmul.f32 %v85, %v89
  %vm91 = vweird.f32 %v84
  %vm92 = vweird.f32 %v85
  %vm93 = vmor %vm91, %vm92
  %v94 = vsel %vm93, %v85, %v90
  %v95 = vmul.f32 %v83, %v94
  %97 = vset.pattern.permute.xlu0 0
  %98 = vperm.xlu0 %97, %v95
  %v99 = vpop.permute.xlu0 %98
  %v101 = vunpack.c.l.s4 839922192
  %v102 = vunpack.c.0.s8 %v101
  %v103 = vperm.slane %v99, %v102
  %v105 = vmul.f32 %v52, %v103
  %v106 = vmul.f32 %v53, %v103
  %v107 = vld [vmem:[%s2] sm:$0xf]
  %109 = vset.pattern.permute.xlu0 0
  %110 = vperm.xlu0 %109, %v107
  %v111 = vpop.permute.xlu0 %110
  %v113 = vunpack.c.l.s4 839922192
  %v114 = vunpack.c.0.s8 %v113
  %v115 = vperm.slane %v111, %v114
  %v117 = vadd.f32 %v105, %v115
  %v118 = vadd.f32 %v106, %v115
  %121 = vst [vmem:[#allocation1] ss:$2 sm:$0xff] %v117
  %v122 = vld.sshfl [vmem:[#allocation1] sm:$0xff pattern:$0x75316420]
  %v123 = vld.sshfl [vmem:[#allocation1 + $0x8] sm:$0xff pattern:$0x75316420]
  %s124 = scalar_lea.vmem [#allocation1], 16
  %125 = vst [vmem:[%s124] ss:$2 sm:$0xff] %v118
  %v126 = vld.sshfl [vmem:[#allocation1 + $0x10] sm:$0xff pattern:$0x75316420]
  %v127 = vld.sshfl [vmem:[#allocation1 + $0x18] sm:$0xff pattern:$0x75316420]
  %v132 = vpack.c.bf16 %v123, %v122
  %v133 = vpack.c.bf16 %v127, %v126
  %v136 = vrot.slane %v132, 2
  %v137 = vrot.slane %v133, 2
  %vm138 = vcmask 1041408
  %v141 = vsel %vm138, %v132, %v136
  %v144 = vsel %vm138, %v133, %v137
  %147 = vst [vmem:[%s3] sm:$0xf] %v141
  %148 = vst [vmem:[%s3 + $0x4] sm:$0xf] %v144
  // Predicated region
  $region14: #{batchnorm_wrapper_forward.1} parent=0 // pred_check
    _
  $region15: #{batchnorm_wrapper_forward.1} parent=0 // pred_check_branch
    %150 = sbr.rel (0) target = $region17
  $region16: #{batchnorm_wrapper_forward.1} parent=0 // pred_region
    _
  $region17: #{batchnorm_wrapper_forward.1} parent=0 // pred_fallthru
    _
  // Predicated region
  $region18: #{batchnorm_wrapper_forward.1} parent=0 // pred_check
    _
  $region19: #{batchnorm_wrapper_forward.1} parent=0 // pred_check_branch
    %152 = sbr.rel (0) target = $region21
  $region20: #{batchnorm_wrapper_forward.1} parent=0 // pred_region
    _
  $region21: #{batchnorm_wrapper_forward.1} parent=0 // pred_fallthru
    _

</llo_original>
